<compile_context>
chip_gen: v7x
topology: tpu7x:2x2x1
jax: 0.10.0
libtpu: 0.0.40
codegen_flags: <defaults>
</compile_context>

<pallas_src>
import functools

import jax
import jax.numpy as jnp
from jax.experimental import pallas as pl
from jax.experimental.pallas import tpu as pltpu


def _round_up(x, m):
    return ((x + m - 1) // m) * m


def _double_q_kernel(hidden_dim, fuse_w2,
                     x_ref, w1_ref, w2_ref, w3_ref, b_ref, q_ref):
    """Fused twin-Q MLP: x -> (q1, q2) packed as the (tile_b, 2) output block."""
    x = x_ref[...]
    b1 = b_ref[0:1, :]          # (1, 2H)
    b2 = b_ref[1:2, :]          # (1, 2H)
    b3 = b_ref[2:3, 0:2]        # (1, 2)

    # Layer 1: one MXU pass over the fused (in_dim, 2H) weight.
    h = jnp.dot(x, w1_ref[...], preferred_element_type=jnp.float32) + b1
    h = jnp.maximum(h, 0.0)

    # Layer 2.
    if fuse_w2:
        # Block-diagonal (2H, 2H): both heads ride one systolic pass.
        h = jnp.dot(h, w2_ref[...], preferred_element_type=jnp.float32) + b2
    else:
        # Large hidden: avoid 2x FLOPs of block-diag; two per-head passes.
        H = hidden_dim
        h1 = jnp.dot(h[:, :H], w2_ref[:H, :], preferred_element_type=jnp.float32)
        h2 = jnp.dot(h[:, H:], w2_ref[H:, :], preferred_element_type=jnp.float32)
        h = jnp.concatenate([h1, h2], axis=-1) + b2
    h = jnp.maximum(h, 0.0)

    # Layer 3: (2H, 2) block-structured weight emits (tile_b, 2) directly
    # (column 0 = q1, column 1 = q2) -> single lane-contiguous store.
    q_ref[...] = jnp.dot(h, w3_ref[...], preferred_element_type=jnp.float32) + b3


def _prep_params(q1_params, q2_params, hidden_dim, fuse_w2):
    """Pack both heads' 12 weight/bias arrays into 4 lane-dense f32 slabs."""
    w1_1, b1_1, w2_1, b2_1, w3_1, b3_1 = [jnp.asarray(a, jnp.float32)
                                          for a in q1_params]
    w1_2, b1_2, w2_2, b2_2, w3_2, b3_2 = [jnp.asarray(a, jnp.float32)
                                          for a in q2_params]
    H = hidden_dim

    # Fused layer-1 weight: (in_dim, 2H).
    w1 = jnp.concatenate([w1_1, w1_2], axis=1)

    # Layer-2 weight: block-diagonal (2H, 2H) when fused, stacked (2H, H) else.
    if fuse_w2:
        z = jnp.zeros((H, H), jnp.float32)
        w2 = jnp.concatenate(
            [jnp.concatenate([w2_1, z], axis=1),
             jnp.concatenate([z, w2_2], axis=1)], axis=0)
    else:
        w2 = jnp.concatenate([w2_1, w2_2], axis=0)

    # Layer-3 weight: (2H, 2), column 0 = head 1, column 1 = head 2.
    w3 = jnp.zeros((2 * H, 2), jnp.float32)
    w3 = w3.at[:H, 0].set(w3_1.reshape(-1))
    w3 = w3.at[H:, 1].set(w3_2.reshape(-1))

    # Bias slab (3, 2H): row 0 = b1, row 1 = b2, row 2 = [b3_1, b3_2, 0...].
    b1 = jnp.concatenate([b1_1.reshape(1, H), b1_2.reshape(1, H)], axis=1)
    b2 = jnp.concatenate([b2_1.reshape(1, H), b2_2.reshape(1, H)], axis=1)
    b3 = jnp.zeros((1, 2 * H), jnp.float32)
    b3 = b3.at[0, 0].set(b3_1.reshape(())).at[0, 1].set(b3_2.reshape(()))
    bias = jnp.concatenate([b1, b2, b3], axis=0)

    return w1, w2, w3, bias


def double_q_critic_forward(obs, action, q1_params, q2_params, *, tile_b=1024):
    """Returns (q1, q2), each (B, 1) float32."""
    assert obs.shape[0] == action.shape[0]
    B = obs.shape[0]

    # cast_float=True path of the module: everything in f32.
    obs = obs.astype(jnp.float32)
    action = action.astype(jnp.float32)

    # torch.cat([obs, action], -1) done once here (cheap fused XLA copy) so the
    # kernel runs a single K=(obs_dim+act_dim) layer-1 matmul.
    x = jnp.concatenate([obs, action], axis=-1)
    in_dim = x.shape[1]

    H = q1_params[2].shape[0]          # w2 is (H, H)
    fuse_w2 = (2 * H) <= 256           # both heads fit one MXU pass
    w1, w2, w3, bias = _prep_params(q1_params, q2_params, H, fuse_w2)

    # Batch tile: as large as reasonable (amortize per-step overhead), multiple
    # of 8, never larger than the (rounded) batch, and capped so the grid has
    # >= 2 steps whenever possible (so the "parallel" axis uses both v7x TCs).
    tile_b = max(8, int(tile_b))
    tile_b = min(tile_b, _round_up(B, 8))
    tile_b = min(tile_b, max(8, _round_up(pl.cdiv(B, 2), 8)))
    tile_b = _round_up(tile_b, 8)
    grid = (pl.cdiv(B, tile_b),)       # ragged last block, no host-side pad

    kernel = functools.partial(_double_q_kernel, H, fuse_w2)

    def const_spec(a):
        # Full-array block, constant index -> weights stay VMEM-resident.
        return pl.BlockSpec(a.shape, lambda i: (0, 0))

    q_pair = pl.pallas_call(
        kernel,
        grid=grid,
        in_specs=[
            pl.BlockSpec((tile_b, in_dim), lambda i: (i, 0)),
            const_spec(w1),
            const_spec(w2),
            const_spec(w3),
            const_spec(bias),
        ],
        out_specs=pl.BlockSpec((tile_b, 2), lambda i: (i, 0)),
        out_shape=jax.ShapeDtypeStruct((B, 2), jnp.float32),
        compiler_params=pltpu.CompilerParams(
            dimension_semantics=("parallel",)),
    )(x, w1, w2, w3, bias)

    return q_pair[:, 0:1], q_pair[:, 1:2]


def init_q_params(key, in_dim, hidden_dim):
    """Synthetic deterministic init for one Q head (hidden_depth=2 mlp)."""
    ks = jax.random.split(key, 3)

    def lin(k, din, dout):
        w = jax.random.normal(k, (din, dout), jnp.float32) / jnp.sqrt(din)
        b = jnp.zeros((1, dout), jnp.float32)
        return w, b

    w1, b1 = lin(ks[0], in_dim, hidden_dim)
    w2, b2 = lin(ks[1], hidden_dim, hidden_dim)
    w3, b3 = lin(ks[2], hidden_dim, 1)
    return (w1, b1, w2, b2, w3, b3)


def _ref_q(obs, action, params):
    """Pure-jnp reference matching the PyTorch forward."""
    x = jnp.concatenate([obs, action], axis=-1)
    w1, b1, w2, b2, w3, b3 = params
    h = jnp.maximum(x @ w1 + b1, 0.0)
    h = jnp.maximum(h @ w2 + b2, 0.0)
    return h @ w3 + b3


if __name__ == "__main__":
    # Small shapes consistent with the module (hidden_depth=2 MLP heads).
    B, OBS_DIM, ACTION_DIM, HIDDEN_DIM = 64, 17, 6, 32

    key = jax.random.PRNGKey(0)
    k_obs, k_act, k_q1, k_q2 = jax.random.split(key, 4)

    obs = jax.random.normal(k_obs, (B, OBS_DIM), jnp.float32)
    action = jax.random.normal(k_act, (B, ACTION_DIM), jnp.float32)
    q1_params = init_q_params(k_q1, OBS_DIM + ACTION_DIM, HIDDEN_DIM)
    q2_params = init_q_params(k_q2, OBS_DIM + ACTION_DIM, HIDDEN_DIM)

    # Default tile_b is large; the >=2-grid-step cap makes this run with a
    # 2-step pipelined grid at B=64, exercising the ragged/pipelined path.
    q1, q2 = double_q_critic_forward(obs, action, q1_params, q2_params)
    jax.block_until_ready((q1, q2))

    assert q1.shape == (B, 1) and q2.shape == (B, 1)
    assert bool(jnp.all(jnp.isfinite(q1))) and bool(jnp.all(jnp.isfinite(q2)))

    q1_ref = _ref_q(obs, action, q1_params)
    q2_ref = _ref_q(obs, action, q2_params)
    assert bool(jnp.allclose(q1, q1_ref, rtol=1e-5, atol=1e-5))
    assert bool(jnp.allclose(q2, q2_ref, rtol=1e-5, atol=1e-5))

    print("KERNEL_OK")
</pallas_src>

<mosaic_0001>
module attributes {stable_mosaic.version = 11 : i64} {
  func.func @_double_q_kernel(%arg0: i32, %arg1: memref<32x23xf32, #tpu.memory_space<vmem>>, %arg2: memref<23x64xf32, #tpu.memory_space<vmem>>, %arg3: memref<64x64xf32, #tpu.memory_space<vmem>>, %arg4: memref<64x2xf32, #tpu.memory_space<vmem>>, %arg5: memref<3x64xf32, #tpu.memory_space<vmem>>, %arg6: memref<32x2xf32, #tpu.memory_space<vmem>>) attributes {dimension_semantics = [#tpu.dimension_semantics<parallel>], iteration_bounds = array<i64: 2>, scalar_prefetch = 0 : i64, scratch_operands = 0 : i64, tpu.core_type = #tpu.core_type<tc>, window_params = [{transform_indices = @transform_0, window_bounds = array<i64: 32, 23>}, {pipeline_mode = #tpu.pipeline_mode<synchronous>, transform_indices = @transform_1, window_bounds = array<i64: 23, 64>}, {pipeline_mode = #tpu.pipeline_mode<synchronous>, transform_indices = @transform_2, window_bounds = array<i64: 64, 64>}, {pipeline_mode = #tpu.pipeline_mode<synchronous>, transform_indices = @transform_3, window_bounds = array<i64: 64, 2>}, {pipeline_mode = #tpu.pipeline_mode<synchronous>, transform_indices = @transform_4, window_bounds = array<i64: 3, 64>}, {transform_indices = @transform_5, window_bounds = array<i64: 32, 2>}]} {
    %c0 = arith.constant 0 : index
    %c0_0 = arith.constant 0 : index
    %0 = vector.load %arg1[%c0, %c0_0] : memref<32x23xf32, #tpu.memory_space<vmem>>, vector<32x23xf32>
    %c0_1 = arith.constant 0 : index
    %c0_2 = arith.constant 0 : index
    %1 = vector.load %arg5[%c0_1, %c0_2] : memref<3x64xf32, #tpu.memory_space<vmem>>, vector<1x64xf32>
    %c1 = arith.constant 1 : index
    %c0_3 = arith.constant 0 : index
    %2 = vector.load %arg5[%c1, %c0_3] : memref<3x64xf32, #tpu.memory_space<vmem>>, vector<1x64xf32>
    %c2 = arith.constant 2 : index
    %c0_4 = arith.constant 0 : index
    %3 = vector.load %arg5[%c2, %c0_4] : memref<3x64xf32, #tpu.memory_space<vmem>>, vector<1x2xf32>
    %c0_5 = arith.constant 0 : index
    %c0_6 = arith.constant 0 : index
    %4 = vector.load %arg2[%c0_5, %c0_6] : memref<23x64xf32, #tpu.memory_space<vmem>>, vector<23x64xf32>
    %cst = arith.constant dense<0.000000e+00> : vector<32x64xf32>
    %5 = tpu.matmul %0, %4, %cst {dimension_numbers = #tpu.dot_dimension_numbers<[1], [0], [0], [1], [0, 0, 1, 1], [], []>} : vector<32x23xf32>, vector<23x64xf32>, vector<32x64xf32> -> vector<32x64xf32>
    %6 = vector.broadcast %1 : vector<1x64xf32> to vector<32x64xf32>
    %7 = arith.addf %5, %6 : vector<32x64xf32>
    %cst_7 = arith.constant 0.000000e+00 : f32
    %8 = vector.broadcast %cst_7 : f32 to vector<32x64xf32>
    %9 = arith.maximumf %7, %8 : vector<32x64xf32>
    %c0_8 = arith.constant 0 : index
    %c0_9 = arith.constant 0 : index
    %10 = vector.load %arg3[%c0_8, %c0_9] : memref<64x64xf32, #tpu.memory_space<vmem>>, vector<64x64xf32>
    %cst_10 = arith.constant dense<0.000000e+00> : vector<32x64xf32>
    %11 = tpu.matmul %9, %10, %cst_10 {dimension_numbers = #tpu.dot_dimension_numbers<[1], [0], [0], [1], [0, 0, 1, 1], [], []>} : vector<32x64xf32>, vector<64x64xf32>, vector<32x64xf32> -> vector<32x64xf32>
    %12 = vector.broadcast %2 : vector<1x64xf32> to vector<32x64xf32>
    %13 = arith.addf %11, %12 : vector<32x64xf32>
    %cst_11 = arith.constant 0.000000e+00 : f32
    %14 = vector.broadcast %cst_11 : f32 to vector<32x64xf32>
    %15 = arith.maximumf %13, %14 : vector<32x64xf32>
    %c0_12 = arith.constant 0 : index
    %c0_13 = arith.constant 0 : index
    %16 = vector.load %arg4[%c0_12, %c0_13] : memref<64x2xf32, #tpu.memory_space<vmem>>, vector<64x2xf32>
    %cst_14 = arith.constant dense<0.000000e+00> : vector<32x2xf32>
    %17 = tpu.matmul %15, %16, %cst_14 {dimension_numbers = #tpu.dot_dimension_numbers<[1], [0], [0], [1], [0, 0, 1, 1], [], []>} : vector<32x64xf32>, vector<64x2xf32>, vector<32x2xf32> -> vector<32x2xf32>
    %18 = vector.broadcast %3 : vector<1x2xf32> to vector<32x2xf32>
    %19 = arith.addf %17, %18 : vector<32x2xf32>
    %c0_15 = arith.constant 0 : index
    %c0_16 = arith.constant 0 : index
    %20 = vector.load %arg6[%c0_15, %c0_16] : memref<32x2xf32, #tpu.memory_space<vmem>>, vector<32x2xf32>
    tpu.vector_store %arg6[%c0_15, %c0_16], %19 {strides = array<i32>} : memref<32x2xf32, #tpu.memory_space<vmem>>, vector<32x2xf32>,
    return
  }
  func.func @transform_0(%arg0: i32) -> (i32, i32) {
    %c0_i32 = arith.constant 0 : i32
    %c0_i32_0 = arith.constant 0 : i32
    return %arg0, %c0_i32 : i32, i32
  }
  func.func @transform_1(%arg0: i32) -> (i32, i32) {
    %c0_i32 = arith.constant 0 : i32
    %c0_i32_0 = arith.constant 0 : i32
    %c0_i32_1 = arith.constant 0 : i32
    return %c0_i32, %c0_i32_0 : i32, i32
  }
  func.func @transform_2(%arg0: i32) -> (i32, i32) {
    %c0_i32 = arith.constant 0 : i32
    %c0_i32_0 = arith.constant 0 : i32
    %c0_i32_1 = arith.constant 0 : i32
    return %c0_i32, %c0_i32_0 : i32, i32
  }
  func.func @transform_3(%arg0: i32) -> (i32, i32) {
    %c0_i32 = arith.constant 0 : i32
    %c0_i32_0 = arith.constant 0 : i32
    %c0_i32_1 = arith.constant 0 : i32
    return %c0_i32, %c0_i32_0 : i32, i32
  }
  func.func @transform_4(%arg0: i32) -> (i32, i32) {
    %c0_i32 = arith.constant 0 : i32
    %c0_i32_0 = arith.constant 0 : i32
    %c0_i32_1 = arith.constant 0 : i32
    return %c0_i32, %c0_i32_0 : i32, i32
  }
  func.func @transform_5(%arg0: i32) -> (i32, i32) {
    %c0_i32 = arith.constant 0 : i32
    %c0_i32_0 = arith.constant 0 : i32
    return %arg0, %c0_i32 : i32, i32
  }
}

</mosaic_0001>

<llo_original>
// kernel: tpu_custom_call.1
$region0: #{tpu_custom_call.1}
  #allocation0 [shape = 'u32[]', space=smem, size = 0x4, offset = 0x4, fixed_abs, tag = 'smem constant byte address 0x4 - core index']
  #allocation1 [shape = 'u32[144,128]{1,0:T(1,128)}', space=vmem, size = 0x12000, scoped, tag = 'internal scratch']
  %s0 = inlined_call_operand.vmem [shape: f32[64,23], index: 0, kind: input, shape index: {}]
  %s1 = inlined_call_operand.vmem [shape: f32[23,64], index: 1, kind: input, shape index: {}]
  %s2 = inlined_call_operand.vmem [shape: f32[64,64], index: 2, kind: input, shape index: {}]
  %s3 = inlined_call_operand.vmem [shape: f32[64,2], index: 3, kind: input, shape index: {}]
  %s4 = inlined_call_operand.vmem [shape: f32[3,64], index: 4, kind: input, shape index: {}]
  %s5 = inlined_call_operand.vmem [shape: f32[64,2], index: 5, kind: output, shape index: {}]
  %s6 = sld [smem:[#allocation0]]
  $region53: #{tpu_custom_call.1} parent=0
    _
  %s8 = ssub.s32 1, %s6
  %s9 = scalar_select 0, %s8, %s6
  loop: start=0, step=1, limit=4
  $region2: #{tpu_custom_call.1} parent=0 // loop_pre_header
    _
  $region3: #{tpu_custom_call.1} parent=0 // loop_header
    %s11 = sphi 0, %s15
    %p12 = scmp.ge.s32.totalorder %s11, 4
    %s21 = sphi 0, %s23
    %s24 = sphi 0, %s21
    %s25 = sphi 0, %s24
    %s41 = sphi 0, %s25
    %s45 = sphi 0, %s45
    %s47 = sphi 0, %s45
    %s48 = sphi 0, %s47
    %s62 = sphi 0, %s48
    %s66 = sphi 0, %s66
    %s68 = sphi 0, %s66
    %s69 = sphi 0, %s68
    %s83 = sphi 0, %s69
    %s87 = sphi 0, %s87
    %s89 = sphi 0, %s87
    %s90 = sphi 0, %s89
    %s104 = sphi 0, %s90
    %s108 = sphi 0, %s108
    %s110 = sphi 0, %s108
    %s111 = sphi 0, %s110
    %s125 = sphi 0, %s111
    %s131 = sphi 0, %s133
    %s134 = sphi 0, %s131
    %s135 = sphi 0, %s134
    %s151 = sphi 0, %s135
  $region4: #{tpu_custom_call.1} parent=0 // loop_header_branch
    %14 = sbr.rel (%p12) target = $region8
  $region5: #{tpu_custom_call.1} parent=0 // loop_body
    %s16 = ssub.s32 %s11, 1
    %s17 = ssub.s32 %s11, 2
    %s18 = sadd.s32 %s11, 1
    %s19 = ssub.s32 %s11, %s18
    %p20 = scmp.eq.s32.totalorder %s19, 0
    %s22 = sadd.s32 %s21, 1
    %s23 = scalar_select %p20, %s21, %s22
    %p26 = pneg %p20
    %p27 = scmp.eq.s32.totalorder %s11, 1
    %p28 = por %p26, %p27
    %p29 = scmp.ne.s32.totalorder %s21, %s24
    %p30 = scmp.eq.s32.totalorder %s11, 0
    %p31 = por %p29, %p30
    %p32 = scmp.ne.s32.totalorder %s21, %s24
    %p33 = scmp.eq.s32.totalorder %s16, 1
    %p34 = por %p32, %p33
    %p35 = scmp.ne.s32.totalorder %s24, %s25
    %p36 = scmp.eq.s32.totalorder %s16, 0
    %p37 = por %p35, %p36
    %p38 = scmp.ne.s32.totalorder %s24, %s25
    %p39 = scmp.eq.s32.totalorder %s17, 1
    %p40 = por %p38, %p39
    %p42 = scmp.ne.s32.totalorder %s25, %s41
    %p43 = scmp.eq.s32.totalorder %s17, 0
    %p44 = por %p42, %p43
    %s46 = sadd.s32 %s45, 1
    %p49 = scmp.eq.s32.totalorder %s11, 1
    %p50 = scmp.ne.s32.totalorder %s45, %s47
    %p51 = scmp.eq.s32.totalorder %s11, 0
    %p52 = por %p50, %p51
    %p53 = scmp.ne.s32.totalorder %s45, %s47
    %p54 = scmp.eq.s32.totalorder %s16, 1
    %p55 = por %p53, %p54
    %p56 = scmp.ne.s32.totalorder %s47, %s48
    %p57 = scmp.eq.s32.totalorder %s16, 0
    %p58 = por %p56, %p57
    %p59 = scmp.ne.s32.totalorder %s47, %s48
    %p60 = scmp.eq.s32.totalorder %s17, 1
    %p61 = por %p59, %p60
    %p63 = scmp.ne.s32.totalorder %s48, %s62
    %p64 = scmp.eq.s32.totalorder %s17, 0
    %p65 = por %p63, %p64
    %s67 = sadd.s32 %s66, 1
    %p70 = scmp.eq.s32.totalorder %s11, 1
    %p71 = scmp.ne.s32.totalorder %s66, %s68
    %p72 = scmp.eq.s32.totalorder %s11, 0
    %p73 = por %p71, %p72
    %p74 = scmp.ne.s32.totalorder %s66, %s68
    %p75 = scmp.eq.s32.totalorder %s16, 1
    %p76 = por %p74, %p75
    %p77 = scmp.ne.s32.totalorder %s68, %s69
    %p78 = scmp.eq.s32.totalorder %s16, 0
    %p79 = por %p77, %p78
    %p80 = scmp.ne.s32.totalorder %s68, %s69
    %p81 = scmp.eq.s32.totalorder %s17, 1
    %p82 = por %p80, %p81
    %p84 = scmp.ne.s32.totalorder %s69, %s83
    %p85 = scmp.eq.s32.totalorder %s17, 0
    %p86 = por %p84, %p85
    %s88 = sadd.s32 %s87, 1
    %p91 = scmp.eq.s32.totalorder %s11, 1
    %p92 = scmp.ne.s32.totalorder %s87, %s89
    %p93 = scmp.eq.s32.totalorder %s11, 0
    %p94 = por %p92, %p93
    %p95 = scmp.ne.s32.totalorder %s87, %s89
    %p96 = scmp.eq.s32.totalorder %s16, 1
    %p97 = por %p95, %p96
    %p98 = scmp.ne.s32.totalorder %s89, %s90
    %p99 = scmp.eq.s32.totalorder %s16, 0
    %p100 = por %p98, %p99
    %p101 = scmp.ne.s32.totalorder %s89, %s90
    %p102 = scmp.eq.s32.totalorder %s17, 1
    %p103 = por %p101, %p102
    %p105 = scmp.ne.s32.totalorder %s90, %s104
    %p106 = scmp.eq.s32.totalorder %s17, 0
    %p107 = por %p105, %p106
    %s109 = sadd.s32 %s108, 1
    %p112 = scmp.eq.s32.totalorder %s11, 1
    %p113 = scmp.ne.s32.totalorder %s108, %s110
    %p114 = scmp.eq.s32.totalorder %s11, 0
    %p115 = por %p113, %p114
    %p116 = scmp.ne.s32.totalorder %s108, %s110
    %p117 = scmp.eq.s32.totalorder %s16, 1
    %p118 = por %p116, %p117
    %p119 = scmp.ne.s32.totalorder %s110, %s111
    %p120 = scmp.eq.s32.totalorder %s16, 0
    %p121 = por %p119, %p120
    %p122 = scmp.ne.s32.totalorder %s110, %s111
    %p123 = scmp.eq.s32.totalorder %s17, 1
    %p124 = por %p122, %p123
    %p126 = scmp.ne.s32.totalorder %s111, %s125
    %p127 = scmp.eq.s32.totalorder %s17, 0
    %p128 = por %p126, %p127
    %s129 = ssub.s32 %s11, %s18
    %p130 = scmp.eq.s32.totalorder %s129, 0
    %s132 = sadd.s32 %s131, 1
    %s133 = scalar_select %p130, %s131, %s132
    %p136 = pneg %p130
    %p137 = scmp.eq.s32.totalorder %s11, 1
    %p138 = por %p136, %p137
    %p139 = scmp.ne.s32.totalorder %s131, %s134
    %p140 = scmp.eq.s32.totalorder %s11, 0
    %p141 = por %p139, %p140
    %p142 = scmp.ne.s32.totalorder %s131, %s134
    %p143 = scmp.eq.s32.totalorder %s16, 1
    %p144 = por %p142, %p143
    %p145 = scmp.ne.s32.totalorder %s134, %s135
    %p146 = scmp.eq.s32.totalorder %s16, 0
    %p147 = por %p145, %p146
    %p148 = scmp.ne.s32.totalorder %s134, %s135
    %p149 = scmp.eq.s32.totalorder %s17, 1
    %p150 = por %p148, %p149
    %p152 = scmp.ne.s32.totalorder %s135, %s151
    %p153 = scmp.eq.s32.totalorder %s17, 0
    %p154 = por %p152, %p153
    %p155 = scmp.le.s32.totalorder 1, %s11
    %p156 = scmp.lt.s32.totalorder %s11, 3
    %p157 = pnand %p155, %p156
    %p158 = pneg %p157
    // Predicated region
    $region9: #{tpu_custom_call.1} parent=5 // pred_check
      _
    $region10: #{tpu_custom_call.1} parent=5 // pred_check_branch
      %160 = sbr.rel (%p157) target = $region12
    $region11: #{tpu_custom_call.1} parent=5 // pred_region
      %s161 = ssub.s32 %s11, 1
      // Predicated region
      $region13: #{tpu_custom_call.1} parent=11 // pred_check
        %p162 = pneg %p58
      $region14: #{tpu_custom_call.1} parent=11 // pred_check_branch
        %164 = sbr.rel (%p162) target = $region16
      $region15: #{tpu_custom_call.1} parent=11 // pred_region
        _
      $region16: #{tpu_custom_call.1} parent=11 // pred_fallthru
        _
      // Predicated region
      $region17: #{tpu_custom_call.1} parent=11 // pred_check
        %p165 = pneg %p79
      $region18: #{tpu_custom_call.1} parent=11 // pred_check_branch
        %167 = sbr.rel (%p165) target = $region20
      $region19: #{tpu_custom_call.1} parent=11 // pred_region
        _
      $region20: #{tpu_custom_call.1} parent=11 // pred_fallthru
        _
      // Predicated region
      $region21: #{tpu_custom_call.1} parent=11 // pred_check
        %p168 = pneg %p100
      $region22: #{tpu_custom_call.1} parent=11 // pred_check_branch
        %170 = sbr.rel (%p168) target = $region24
      $region23: #{tpu_custom_call.1} parent=11 // pred_region
        _
      $region24: #{tpu_custom_call.1} parent=11 // pred_fallthru
        _
      // Predicated region
      $region25: #{tpu_custom_call.1} parent=11 // pred_check
        %p171 = pneg %p121
      $region26: #{tpu_custom_call.1} parent=11 // pred_check_branch
        %173 = sbr.rel (%p171) target = $region28
      $region27: #{tpu_custom_call.1} parent=11 // pred_region
        _
      $region28: #{tpu_custom_call.1} parent=11 // pred_fallthru
        _
    $region12: #{tpu_custom_call.1} parent=5 // pred_fallthru
      _
    %p174 = scmp.lt.s32.totalorder %s11, 2
    // Predicated region
    $region29: #{tpu_custom_call.1} parent=5 // pred_check
      %p175 = pneg %p174
    $region30: #{tpu_custom_call.1} parent=5 // pred_check_branch
      %177 = sbr.rel (%p175) target = $region32
    $region31: #{tpu_custom_call.1} parent=5 // pred_region
      // Predicated region
      $region33: #{tpu_custom_call.1} parent=31 // pred_check
        %p178 = pneg %p31
      $region34: #{tpu_custom_call.1} parent=31 // pred_check_branch
        %180 = sbr.rel (%p178) target = $region36
      $region35: #{tpu_custom_call.1} parent=31 // pred_region
        %s181 = smul.u32 4, %s11
        %p182 = scmp.lt.s32.totalorder %s181, 7
        %s183 = scalar_select %p182, %s181, 7
        %s184 = smul.addr %s183, 8
        %s185 = scalar_lea.vmem %s0, %s184
        %s186 = smul.u32 4, %s11
      $region36: #{tpu_custom_call.1} parent=31 // pred_fallthru
        _
    $region32: #{tpu_custom_call.1} parent=5 // pred_fallthru
      _
    %p187 = scmp.le.s32.totalorder 1, %s11
    %p188 = scmp.lt.s32.totalorder %s11, 3
    %p189 = pnand %p187, %p188
    %p190 = pneg %p189
    // Predicated region
    $region37: #{tpu_custom_call.1} parent=5 // pred_check
      _
    $region38: #{tpu_custom_call.1} parent=5 // pred_check_branch
      %192 = sbr.rel (%p189) target = $region40
    $region39: #{tpu_custom_call.1} parent=5 // pred_region
      %s193 = ssub.s32 %s11, 1
      %s194 = smul.u32 4, %s16
      %p195 = scmp.lt.s32.totalorder %s194, 7
      %s196 = scalar_select %p195, %s194, 7
      %s197 = smul.addr %s196, 8
      %s198 = scalar_lea.vmem %s0, %s197
      %p199 = pneg %p37
      %p200 = pneg %p34
      %p201 = pneg %p58
      %p202 = pneg %p55
      %p203 = pneg %p79
      %p204 = pneg %p76
      %p205 = pneg %p100
      %p206 = pneg %p97
      %p207 = pneg %p121
      %p208 = pneg %p118
      %p209 = pneg %p147
      %p210 = pneg %p144
      %s211 = smul.u32 4, %s16
      %p212 = scmp.lt.s32.totalorder %s211, 7
      %s213 = scalar_select %p212, %s211, 7
      %s214 = smul.addr %s213, 8
      %s215 = scalar_lea.vmem %s5, %s214
      %s216 = smul.u32 4, %s16
      %p217 = scmp.lt.s32.totalorder %s216, 7
      %s218 = scalar_select %p217, %s216, 7
      %s219 = smul.addr %s218, 8
      %s220 = scalar_lea.vmem %s0, %s219
      %s221 = smul.u32 4, %s16
      %s222 = smul.u32 4, %s16
      %p223 = scmp.lt.s32.totalorder %s222, 7
      %s224 = scalar_select %p223, %s222, 7
      %s225 = smul.addr %s224, 8
      %s226 = scalar_lea.vmem %s5, %s225
      %s227 = smul.u32 4, %s16
      %v228 = vld [vmem:[%s220] sm:$0xff]
      %v229 = vld [vmem:[%s220 + $0x8] sm:$0xff]
      %v230 = vld [vmem:[%s220 + $0x10] sm:$0xff]
      %v231 = vld [vmem:[%s220 + $0x18] sm:$0xff]
      %v232 = vld [vmem:[%s4] sm:$0x1]
      %v233 = vld [vmem:[%s4 + $0x1] sm:$0x1]
      %v234 = vld [vmem:[%s4 + $0x2] sm:$0x1]
      %v235 = vld [vmem:[%s1] sm:$0xff]
      %v236 = vld [vmem:[%s1 + $0x8] sm:$0xff]
      %v237 = vld [vmem:[%s1 + $0x10] sm:$0x7f]
      %v238 = vlaneseq
      %v239 = vshrl.u32 %v238, 7
      %v240 = vsub.s32 0, %v239
      %v241 = vrot.slane %v232, %v240
      %vm242 = vcmask 187392
      %v244 = vsel %vm242, %v228, 0
      %v247 = vsel %vm242, %v229, 0
      %v250 = vsel %vm242, %v230, 0
      %v253 = vsel %vm242, %v231, 0
      %vm255 = vcmask 1046528
      %v257 = vsel %vm255, %v237, 0
      %259 = vmatprep.subr.mxu0 0.0
      %260 = vmatpush1.msra.mxu0 %v235
      %261 = vmatprep.subr.mxu0 0.0
      %262 = vmatpush1.msra.mxu0 %v236
      %263 = vmatprep.subr.mxu0 0.0
      %264 = vmatpush1.msra.mxu0 %v257
      %265 = vmatprep.subr.mxu0 0.0
      %266 = vmatpush1.msra.mxu0 0.0
      %267 = vmatprep.subr.mxu0 0.0
      %268 = vmatpush1.msra.mxu0 0.0
      %269 = vmatprep.subr.mxu0 0.0
      %270 = vmatpush1.msra.mxu0 0.0
      %271 = vmatprep.subr.mxu0 0.0
      %272 = vmatpush1.msra.mxu0 0.0
      %273 = vmatprep.subr.mxu0 0.0
      %274 = vmatpush1.msra.mxu0 0.0
      %275 = vmatprep.subr.mxu0 0.0
      %276 = vmatpush1.msra.mxu0 0.0
      %277 = vmatprep.subr.mxu0 0.0
      %278 = vmatpush1.msra.mxu0 0.0
      %279 = vmatprep.subr.mxu0 0.0
      %280 = vmatpush1.msra.mxu0 0.0
      %281 = vmatprep.subr.mxu0 0.0
      %282 = vmatpush1.msra.mxu0 0.0
      %283 = vmatprep.subr.mxu0 0.0
      %284 = vmatpush1.msra.mxu0 0.0
      %285 = vmatprep.subr.mxu0 0.0
      %286 = vmatpush1.msra.mxu0 0.0
      %287 = vmatprep.subr.mxu0 0.0
      %288 = vmatpush1.msra.mxu0 0.0
      %289 = vmatprep.subr.mxu0 0.0
      %290 = vmatpush1.msra.mxu0 0.0
      %291 = vmatprep.subr.mxu0 0.0
      %292 = vmatpush1.msra.mxu0 0.0
      %293 = vmatprep.subr.mxu0 0.0
      %294 = vmatpush1.msra.mxu0 0.0
      %295 = vmatprep.subr.mxu0 0.0
      %296 = vmatpush1.msra.mxu0 0.0
      %297 = vmatprep.subr.mxu0 0.0
      %298 = vmatpush1.msra.mxu0 0.0
      %299 = vmatprep.subr.mxu0 0.0
      %300 = vmatpush1.msra.mxu0 0.0
      %301 = vmatprep.subr.mxu0 0.0
      %302 = vmatpush1.msra.mxu0 0.0
      %303 = vmatprep.subr.mxu0 0.0
      %304 = vmatpush1.msra.mxu0 0.0
      %305 = vmatprep.subr.mxu0 0.0
      %306 = vmatpush1.msra.mxu0 0.0
      %307 = vmatprep.subr.mxu0 0.0
      %308 = vmatpush1.msra.mxu0 0.0
      %309 = vmatprep.subr.mxu0 0.0
      %310 = vmatpush1.msra.mxu0 0.0
      %311 = vmatprep.subr.mxu0 0.0
      %312 = vmatpush1.msra.mxu0 0.0
      %313 = vmatprep.subr.mxu0 0.0
      %314 = vmatpush1.msra.mxu0 0.0
      %315 = vmatprep.subr.mxu0 0.0
      %316 = vmatpush1.msra.mxu0 0.0
      %317 = vmatprep.subr.mxu0 0.0
      %318 = vmatpush1.msra.mxu0 0.0
      %319 = vmatprep.subr.mxu0 0.0
      %320 = vmatpush1.msra.mxu0 0.0
      %321 = vmatprep.subr.mxu0 0.0
      %322 = vmatpush1.msra.mxu0 0.0
      %323 = vmatprep.mubr.f32.mxu0 0.0
      %324 = vmatmul.mubr.f32.gmra.mrb[0].mxu0 %v244
      %v325 = vpop.f32.mrb[0].mxu0
      %v326 = vadd.f32 %v241, %v325
      %v327 = vpop.f32.mrb[0].mxu0
      %328 = vmatprep.mubr.f32.mxu0 0.0
      %329 = vmatmul.mubr.f32.gmra.mrb[0].mxu0 %v247
      %v330 = vpop.f32.mrb[0].mxu0
      %v331 = vadd.f32 %v241, %v330
      %v332 = vpop.f32.mrb[0].mxu0
      %333 = vmatprep.mubr.f32.mxu0 0.0
      %334 = vmatmul.mubr.f32.gmra.mrb[0].mxu0 %v250
      %v335 = vpop.f32.mrb[0].mxu0
      %v336 = vadd.f32 %v241, %v335
      %v337 = vpop.f32.mrb[0].mxu0
      %338 = vmatprep.mubr.f32.mxu0 0.0
      %339 = vmatmul.mubr.f32.gmra.mrb[0].mxu0 %v253
      %v340 = vpop.f32.mrb[0].mxu0
      %v341 = vadd.f32 %v241, %v340
      %v342 = vpop.f32.mrb[0].mxu0
      %343 = vdwg.mxu0
      %v344 = vmax.f32 %v326, 0.0
      %v345 = vmax.f32 %v331, 0.0
      %v346 = vmax.f32 %v336, 0.0
      %v347 = vmax.f32 %v341, 0.0
      %v348 = vld [vmem:[%s2] sm:$0xff]
      %v349 = vld [vmem:[%s2 + $0x8] sm:$0xff]
      %v350 = vld [vmem:[%s2 + $0x10] sm:$0xff]
      %v351 = vld [vmem:[%s2 + $0x18] sm:$0xff]
      %v352 = vld [vmem:[%s2 + $0x20] sm:$0xff]
      %v353 = vld [vmem:[%s2 + $0x28] sm:$0xff]
      %v354 = vld [vmem:[%s2 + $0x30] sm:$0xff]
      %v355 = vld [vmem:[%s2 + $0x38] sm:$0xff]
      %v356 = vlaneseq
      %v357 = vshrl.u32 %v356, 7
      %v358 = vsub.s32 0, %v357
      %v359 = vrot.slane %v233, %v358
      %vm360 = vcmask 523264
      %v362 = vsel %vm360, %v344, 0
      %v365 = vsel %vm360, %v345, 0
      %v368 = vsel %vm360, %v346, 0
      %v371 = vsel %vm360, %v347, 0
      %373 = vmatprep.subr.mxu0 0.0
      %374 = vmatpush1.msra.mxu0 %v348
      %375 = vmatprep.subr.mxu0 0.0
      %376 = vmatpush1.msra.mxu0 %v349
      %377 = vmatprep.subr.mxu0 0.0
      %378 = vmatpush1.msra.mxu0 %v350
      %379 = vmatprep.subr.mxu0 0.0
      %380 = vmatpush1.msra.mxu0 %v351
      %381 = vmatprep.subr.mxu0 0.0
      %382 = vmatpush1.msra.mxu0 %v352
      %383 = vmatprep.subr.mxu0 0.0
      %384 = vmatpush1.msra.mxu0 %v353
      %385 = vmatprep.subr.mxu0 0.0
      %386 = vmatpush1.msra.mxu0 %v354
      %387 = vmatprep.subr.mxu0 0.0
      %388 = vmatpush1.msra.mxu0 %v355
      %389 = vmatprep.subr.mxu0 0.0
      %390 = vmatpush1.msra.mxu0 0.0
      %391 = vmatprep.subr.mxu0 0.0
      %392 = vmatpush1.msra.mxu0 0.0
      %393 = vmatprep.subr.mxu0 0.0
      %394 = vmatpush1.msra.mxu0 0.0
      %395 = vmatprep.subr.mxu0 0.0
      %396 = vmatpush1.msra.mxu0 0.0
      %397 = vmatprep.subr.mxu0 0.0
      %398 = vmatpush1.msra.mxu0 0.0
      %399 = vmatprep.subr.mxu0 0.0
      %400 = vmatpush1.msra.mxu0 0.0
      %401 = vmatprep.subr.mxu0 0.0
      %402 = vmatpush1.msra.mxu0 0.0
      %403 = vmatprep.subr.mxu0 0.0
      %404 = vmatpush1.msra.mxu0 0.0
      %405 = vmatprep.subr.mxu0 0.0
      %406 = vmatpush1.msra.mxu0 0.0
      %407 = vmatprep.subr.mxu0 0.0
      %408 = vmatpush1.msra.mxu0 0.0
      %409 = vmatprep.subr.mxu0 0.0
      %410 = vmatpush1.msra.mxu0 0.0
      %411 = vmatprep.subr.mxu0 0.0
      %412 = vmatpush1.msra.mxu0 0.0
      %413 = vmatprep.subr.mxu0 0.0
      %414 = vmatpush1.msra.mxu0 0.0
      %415 = vmatprep.subr.mxu0 0.0
      %416 = vmatpush1.msra.mxu0 0.0
      %417 = vmatprep.subr.mxu0 0.0
      %418 = vmatpush1.msra.mxu0 0.0
      %419 = vmatprep.subr.mxu0 0.0
      %420 = vmatpush1.msra.mxu0 0.0
      %421 = vmatprep.subr.mxu0 0.0
      %422 = vmatpush1.msra.mxu0 0.0
      %423 = vmatprep.subr.mxu0 0.0
      %424 = vmatpush1.msra.mxu0 0.0
      %425 = vmatprep.subr.mxu0 0.0
      %426 = vmatpush1.msra.mxu0 0.0
      %427 = vmatprep.subr.mxu0 0.0
      %428 = vmatpush1.msra.mxu0 0.0
      %429 = vmatprep.subr.mxu0 0.0
      %430 = vmatpush1.msra.mxu0 0.0
      %431 = vmatprep.subr.mxu0 0.0
      %432 = vmatpush1.msra.mxu0 0.0
      %433 = vmatprep.subr.mxu0 0.0
      %434 = vmatpush1.msra.mxu0 0.0
      %435 = vmatprep.subr.mxu0 0.0
      %436 = vmatpush1.msra.mxu0 0.0
      %437 = vmatprep.mubr.f32.mxu0 0.0
      %438 = vmatmul.mubr.f32.gmra.mrb[0].mxu0 %v362
      %v439 = vpop.f32.mrb[0].mxu0
      %v440 = vadd.f32 %v359, %v439
      %v441 = vpop.f32.mrb[0].mxu0
      %442 = vmatprep.mubr.f32.mxu0 0.0
      %443 = vmatmul.mubr.f32.gmra.mrb[0].mxu0 %v365
      %v444 = vpop.f32.mrb[0].mxu0
      %v445 = vadd.f32 %v359, %v444
      %v446 = vpop.f32.mrb[0].mxu0
      %447 = vmatprep.mubr.f32.mxu0 0.0
      %448 = vmatmul.mubr.f32.gmra.mrb[0].mxu0 %v368
      %v449 = vpop.f32.mrb[0].mxu0
      %v450 = vadd.f32 %v359, %v449
      %v451 = vpop.f32.mrb[0].mxu0
      %452 = vmatprep.mubr.f32.mxu0 0.0
      %453 = vmatmul.mubr.f32.gmra.mrb[0].mxu0 %v371
      %v454 = vpop.f32.mrb[0].mxu0
      %v455 = vadd.f32 %v359, %v454
      %v456 = vpop.f32.mrb[0].mxu0
      %457 = vdwg.mxu0
      %v458 = vmax.f32 %v440, 0.0
      %v459 = vmax.f32 %v445, 0.0
      %v460 = vmax.f32 %v450, 0.0
      %v461 = vmax.f32 %v455, 0.0
      %v462 = vld [vmem:[%s3] sm:$0xff]
      %v463 = vld [vmem:[%s3 + $0x8] sm:$0xff]
      %v464 = vld [vmem:[%s3 + $0x10] sm:$0xff]
      %v465 = vld [vmem:[%s3 + $0x18] sm:$0xff]
      %v466 = vld [vmem:[%s3 + $0x20] sm:$0xff]
      %v467 = vld [vmem:[%s3 + $0x28] sm:$0xff]
      %v468 = vld [vmem:[%s3 + $0x30] sm:$0xff]
      %v469 = vld [vmem:[%s3 + $0x38] sm:$0xff]
      %v470 = vlaneseq
      %v471 = vshrl.u32 %v470, 7
      %v472 = vsub.s32 0, %v471
      %v473 = vrot.slane %v234, %v472
      %v475 = vsel %vm360, %v458, 0
      %v478 = vsel %vm360, %v459, 0
      %v481 = vsel %vm360, %v460, 0
      %v484 = vsel %vm360, %v461, 0
      %486 = vmatprep.subr.mxu0 0.0
      %487 = vmatpush1.msra.mxu0 %v462
      %488 = vmatprep.subr.mxu0 0.0
      %489 = vmatpush1.msra.mxu0 %v463
      %490 = vmatprep.subr.mxu0 0.0
      %491 = vmatpush1.msra.mxu0 %v464
      %492 = vmatprep.subr.mxu0 0.0
      %493 = vmatpush1.msra.mxu0 %v465
      %494 = vmatprep.subr.mxu0 0.0
      %495 = vmatpush1.msra.mxu0 %v466
      %496 = vmatprep.subr.mxu0 0.0
      %497 = vmatpush1.msra.mxu0 %v467
      %498 = vmatprep.subr.mxu0 0.0
      %499 = vmatpush1.msra.mxu0 %v468
      %500 = vmatprep.subr.mxu0 0.0
      %501 = vmatpush1.msra.mxu0 %v469
      %502 = vmatprep.subr.mxu0 0.0
      %503 = vmatpush1.msra.mxu0 0.0
      %504 = vmatprep.subr.mxu0 0.0
      %505 = vmatpush1.msra.mxu0 0.0
      %506 = vmatprep.subr.mxu0 0.0
      %507 = vmatpush1.msra.mxu0 0.0
      %508 = vmatprep.subr.mxu0 0.0
      %509 = vmatpush1.msra.mxu0 0.0
      %510 = vmatprep.subr.mxu0 0.0
      %511 = vmatpush1.msra.mxu0 0.0
      %512 = vmatprep.subr.mxu0 0.0
      %513 = vmatpush1.msra.mxu0 0.0
      %514 = vmatprep.subr.mxu0 0.0
      %515 = vmatpush1.msra.mxu0 0.0
      %516 = vmatprep.subr.mxu0 0.0
      %517 = vmatpush1.msra.mxu0 0.0
      %518 = vmatprep.subr.mxu0 0.0
      %519 = vmatpush1.msra.mxu0 0.0
      %520 = vmatprep.subr.mxu0 0.0
      %521 = vmatpush1.msra.mxu0 0.0
      %522 = vmatprep.subr.mxu0 0.0
      %523 = vmatpush1.msra.mxu0 0.0
      %524 = vmatprep.subr.mxu0 0.0
      %525 = vmatpush1.msra.mxu0 0.0
      %526 = vmatprep.subr.mxu0 0.0
      %527 = vmatpush1.msra.mxu0 0.0
      %528 = vmatprep.subr.mxu0 0.0
      %529 = vmatpush1.msra.mxu0 0.0
      %530 = vmatprep.subr.mxu0 0.0
      %531 = vmatpush1.msra.mxu0 0.0
      %532 = vmatprep.subr.mxu0 0.0
      %533 = vmatpush1.msra.mxu0 0.0
      %534 = vmatprep.subr.mxu0 0.0
      %535 = vmatpush1.msra.mxu0 0.0
      %536 = vmatprep.subr.mxu0 0.0
      %537 = vmatpush1.msra.mxu0 0.0
      %538 = vmatprep.subr.mxu0 0.0
      %539 = vmatpush1.msra.mxu0 0.0
      %540 = vmatprep.subr.mxu0 0.0
      %541 = vmatpush1.msra.mxu0 0.0
      %542 = vmatprep.subr.mxu0 0.0
      %543 = vmatpush1.msra.mxu0 0.0
      %544 = vmatprep.subr.mxu0 0.0
      %545 = vmatpush1.msra.mxu0 0.0
      %546 = vmatprep.subr.mxu0 0.0
      %547 = vmatpush1.msra.mxu0 0.0
      %548 = vmatprep.subr.mxu0 0.0
      %549 = vmatpush1.msra.mxu0 0.0
      %550 = vmatprep.mubr.f32.mxu0 0.0
      %551 = vmatmul.mubr.f32.gmra.mrb[0].mxu0 %v475
      %v552 = vpop.f32.mrb[0].mxu0
      %v553 = vadd.f32 %v473, %v552
      %v554 = vpop.f32.mrb[0].mxu0
      %555 = vmatprep.mubr.f32.mxu0 0.0
      %556 = vmatmul.mubr.f32.gmra.mrb[0].mxu0 %v478
      %v557 = vpop.f32.mrb[0].mxu0
      %v558 = vadd.f32 %v473, %v557
      %v559 = vpop.f32.mrb[0].mxu0
      %560 = vmatprep.mubr.f32.mxu0 0.0
      %561 = vmatmul.mubr.f32.gmra.mrb[0].mxu0 %v481
      %v562 = vpop.f32.mrb[0].mxu0
      %v563 = vadd.f32 %v473, %v562
      %v564 = vpop.f32.mrb[0].mxu0
      %565 = vmatprep.mubr.f32.mxu0 0.0
      %566 = vmatmul.mubr.f32.gmra.mrb[0].mxu0 %v484
      %v567 = vpop.f32.mrb[0].mxu0
      %v568 = vadd.f32 %v473, %v567
      %v569 = vpop.f32.mrb[0].mxu0
      %570 = vdwg.mxu0
      %vm571 = vcmask 15360
      %572 = vst.msk [vmem:[%s226] sm:$0xff] %vm571, %v553
      %573 = vst.msk [vmem:[%s226 + $0x8] sm:$0xff] %vm571, %v558
      %574 = vst.msk [vmem:[%s226 + $0x10] sm:$0xff] %vm571, %v563
      %575 = vst.msk [vmem:[%s226 + $0x18] sm:$0xff] %vm571, %v568
      %s576 = smul.u32 4, %s16
      %p577 = scmp.lt.s32.totalorder %s576, 7
      %s578 = scalar_select %p577, %s576, 7
      %s579 = smul.addr %s578, 8
      %s580 = scalar_lea.vmem %s5, %s579
      // Predicated region
      $region41: #{tpu_custom_call.1} parent=39 // pred_check
        %p581 = pneg %p144
      $region42: #{tpu_custom_call.1} parent=39 // pred_check_branch
        %583 = sbr.rel (%p581) target = $region44
      $region43: #{tpu_custom_call.1} parent=39 // pred_region
        %s584 = smul.u32 4, %s16
      $region44: #{tpu_custom_call.1} parent=39 // pred_fallthru
        _
    $region40: #{tpu_custom_call.1} parent=5 // pred_fallthru
      _
    %p585 = scmp.le.s32.totalorder 2, %s11
    // Predicated region
    $region45: #{tpu_custom_call.1} parent=5 // pred_check
      %p586 = pneg %p585
    $region46: #{tpu_custom_call.1} parent=5 // pred_check_branch
      %588 = sbr.rel (%p586) target = $region48
    $region47: #{tpu_custom_call.1} parent=5 // pred_region
      %s589 = ssub.s32 %s11, 2
      // Predicated region
      $region49: #{tpu_custom_call.1} parent=47 // pred_check
        %p590 = pneg %p150
      $region50: #{tpu_custom_call.1} parent=47 // pred_check_branch
        %592 = sbr.rel (%p590) target = $region52
      $region51: #{tpu_custom_call.1} parent=47 // pred_region
        %s593 = smul.u32 4, %s17
        %p594 = scmp.lt.s32.totalorder %s593, 7
        %s595 = scalar_select %p594, %s593, 7
        %s596 = smul.addr %s595, 8
        %s597 = scalar_lea.vmem %s5, %s596
      $region52: #{tpu_custom_call.1} parent=47 // pred_fallthru
        _
    $region48: #{tpu_custom_call.1} parent=5 // pred_fallthru
      _
  $region6: #{tpu_custom_call.1} parent=0 // loop_footer
    %s15 = sadd.s32 1, %s11
  $region7: #{tpu_custom_call.1} parent=0 // loop_footer_branch
    %10 = sbr.rel target = $region3
  $region8: #{tpu_custom_call.1} parent=0 // loop_exit
    _

</llo_original>
